<compile_context>
chip_gen: v5e
topology: v5e:2x2
jax: 0.10.0
libtpu: 0.0.40
codegen_flags: <defaults>
</compile_context>

<pallas_src>
import functools

import jax
import jax.numpy as jnp
from jax.experimental import pallas as pl
from jax.experimental.pallas import tpu as pltpu


def _round_up(x, m):
    return (x + m - 1) // m * m


def _pad2(a, rows, cols):
    pr, pc = rows - a.shape[0], cols - a.shape[1]
    if pr == 0 and pc == 0:
        return a
    return jnp.pad(a, ((0, pr), (0, pc)))


def _largest_tile(total, limit):
    """Largest multiple of 128 that divides `total` and is <= limit (>=128)."""
    limit = max(128, (limit // 128) * 128)
    for cand in range(limit, 127, -128):
        if total % cand == 0:
            return cand
    return 128


def _vmem_limit_bytes(tm, tn, tk, itemsize=4):
    # 2-deep buffers for X, W, out tiles + bias; cap at 64 MiB (safe on v7x).
    work = 2 * (tm * tk + tk * tn + tm * tn + tn) * itemsize
    return int(min(64 << 20, max(32 << 20, 2 * work)))


# --------------------------------------------------------------------------- #
# Kernels
# --------------------------------------------------------------------------- #
def _fused_linear_relu_kernel(x_ref, w_ref, b_ref, o_ref):
    """out = relu(x @ w + b) — used for the grid-less and single-K-strip paths."""
    acc = jnp.dot(x_ref[...], w_ref[...], preferred_element_type=jnp.float32)
    o_ref[...] = jnp.maximum(acc + b_ref[...], 0.0).astype(o_ref.dtype)


def _multi_k_linear_relu_kernel(x_ref, w_ref, b_ref, o_ref):
    """K-tiled reduction: accumulate directly into the resident f32 output tile."""
    k = pl.program_id(2)

    @pl.when(k == 0)
    def _():
        o_ref[...] = jnp.zeros_like(o_ref)

    o_ref[...] += jnp.dot(x_ref[...], w_ref[...], preferred_element_type=jnp.float32)

    @pl.when(k == pl.num_programs(2) - 1)
    def _():
        o_ref[...] = jnp.maximum(o_ref[...] + b_ref[...], 0.0)


# --------------------------------------------------------------------------- #
# pallas_call wrappers (shapes/tiles are static under jit)
# --------------------------------------------------------------------------- #
@jax.jit
def _small_forward(x, W, b2):
    """Single un-gridded call on unpadded arrays (masked stores are fine here)."""
    M, K = x.shape
    N = W.shape[1]
    vmem = pl.BlockSpec(memory_space=pltpu.MemorySpace.VMEM)
    return pl.pallas_call(
        _fused_linear_relu_kernel,
        out_shape=jax.ShapeDtypeStruct((M, N), x.dtype),
        in_specs=[vmem, vmem, vmem],
        out_specs=pl.BlockSpec(memory_space=pltpu.MemorySpace.VMEM),
        cost_estimate=pl.CostEstimate(
            flops=2 * M * K * N,
            bytes_accessed=(M * K + K * N + N + M * N) * 4,
            transcendentals=0,
        ),
    )(x, W, b2)


@functools.partial(jax.jit, static_argnames=("tm", "tn"))
def _single_k_forward(x_p, W_p, b_p, *, tm, tn):
    """2-D parallel grid; the whole (padded) K strip lives in VMEM per tile."""
    Mp, Kp = x_p.shape
    Np = W_p.shape[1]
    grid = (Mp // tm, Np // tn)
    return pl.pallas_call(
        _fused_linear_relu_kernel,
        out_shape=jax.ShapeDtypeStruct((Mp, Np), x_p.dtype),
        grid_spec=pltpu.PrefetchScalarGridSpec(
            num_scalar_prefetch=0,
            grid=grid,
            in_specs=[
                pl.BlockSpec((tm, Kp), lambda i, j: (i, 0)),   # X strip
                pl.BlockSpec((Kp, tn), lambda i, j: (0, j)),   # W strip
                pl.BlockSpec((1, tn), lambda i, j: (0, j)),    # bias
            ],
            out_specs=pl.BlockSpec((tm, tn), lambda i, j: (i, j)),
        ),
        compiler_params=pltpu.CompilerParams(
            dimension_semantics=("parallel", "parallel"),
            vmem_limit_bytes=_vmem_limit_bytes(tm, tn, Kp),
        ),
        cost_estimate=pl.CostEstimate(
            flops=2 * Mp * Kp * Np,
            bytes_accessed=(Mp * Kp + Kp * Np + Np + Mp * Np) * 4,
            transcendentals=0,
        ),
    )(x_p, W_p, b_p)


@functools.partial(jax.jit, static_argnames=("tm", "tn", "tk"))
def _multi_k_forward(x_p, W_p, b_p, *, tm, tn, tk):
    """3-D grid with K (reduction) last; accumulate into the resident output tile."""
    Mp, Kp = x_p.shape
    Np = W_p.shape[1]
    grid = (Mp // tm, Np // tn, Kp // tk)
    return pl.pallas_call(
        _multi_k_linear_relu_kernel,
        out_shape=jax.ShapeDtypeStruct((Mp, Np), x_p.dtype),
        grid_spec=pltpu.PrefetchScalarGridSpec(
            num_scalar_prefetch=0,
            grid=grid,
            in_specs=[
                pl.BlockSpec((tm, tk), lambda i, j, k: (i, k)),   # X tile
                pl.BlockSpec((tk, tn), lambda i, j, k: (k, j)),   # W tile
                pl.BlockSpec((1, tn), lambda i, j, k: (0, j)),    # bias
            ],
            out_specs=pl.BlockSpec((tm, tn), lambda i, j, k: (i, j)),
        ),
        compiler_params=pltpu.CompilerParams(
            dimension_semantics=("parallel", "parallel", "arbitrary"),
            vmem_limit_bytes=_vmem_limit_bytes(tm, tn, tk),
        ),
        cost_estimate=pl.CostEstimate(
            flops=2 * Mp * Kp * Np,
            bytes_accessed=(Mp * Kp + Kp * Np + Np + Mp * Np) * 4,
            transcendentals=0,
        ),
    )(x_p, W_p, b_p)


# --------------------------------------------------------------------------- #
# Model wrapper: plan + padded weights built once, X padded per call.
# --------------------------------------------------------------------------- #
class PallasBaseModel:
    """Pallas-TPU forward of BaseModel: ReLU(X @ W + b)."""

    SMALL_DIM = 1024       # max unpadded dim for the single-tile bypass
    SMALL_BYTES = 8 << 20  # max total operand bytes for the bypass

    def __init__(self, W, b, *, tm=512, tn=512, tk=512, force_tiled=False):
        K, N = W.shape
        assert b.shape == (N,)
        self.K, self.N = int(K), int(N)
        self.force_tiled = force_tiled

        # Unpadded copies for the tiny-problem bypass path.
        self.W = W
        self.b2 = b.reshape(1, N)

        # ---- Tiled plan: pad weights/bias ONCE here (not per forward call). ----
        Kp = _round_up(self.K, 128)
        Np = _round_up(self.N, 128)
        tn = min(tn, Np)
        if Kp <= max(tk, 1024):   # whole K fits a VMEM strip -> single-K fast path
            tk = Kp
        else:
            tk = min(tk, Kp)
            Kp = _round_up(Kp, tk)
        Np = _round_up(Np, tn)

        self.tm_target, self.tn, self.tk = tm, tn, tk
        self.Kp, self.Np = Kp, Np
        self.W_p = _pad2(W, Kp, Np)
        self.b_p = _pad2(b.reshape(1, N), 1, Np)

    def _is_small(self, M):
        if self.force_tiled:
            return False
        total = (M * self.K + self.K * self.N + M * self.N + self.N) * 4
        return (M <= self.SMALL_DIM and self.K <= self.SMALL_DIM
                and self.N <= self.SMALL_DIM and total <= self.SMALL_BYTES)

    def __call__(self, X):
        M, K = X.shape
        assert K == self.K

        if self._is_small(M):
            return _small_forward(X, self.W, self.b2)

        tm = min(self.tm_target, _round_up(M, 8))
        Mp = _round_up(_round_up(M, 8), tm)
        tn, tk, Kp, Np = self.tn, self.tk, self.Kp, self.Np

        # v7x megacore: ensure >= 2 blocks along a "parallel" axis so both
        # TensorCores get work even when M is small.
        if (Mp // tm) * (Np // tn) < 2 and Np >= 256:
            tn = _largest_tile(Np, Np // 2)

        x_p = _pad2(X, Mp, Kp)
        if Kp == tk:
            out = _single_k_forward(x_p, self.W_p, self.b_p, tm=tm, tn=tn)
        else:
            out = _multi_k_forward(x_p, self.W_p, self.b_p, tm=tm, tn=tn, tk=tk)

        if (Mp, Np) != (M, self.N):
            out = out[:M, :self.N]
        return out


def init_params(key, no_in, no_out):
    """Synthetic init mirroring BaseModel.reset_parameters():
    tau_w ~ Gamma(1,1) (== Exponential(1)); W ~ Normal(0, scale=tau_w);
    b ~ Normal(0,1); var ~ Gamma(1,1) (unused in forward)."""
    k_tau, k_w, k_b, k_var = jax.random.split(key, 4)
    tau_w = jax.random.exponential(k_tau, (1,), dtype=jnp.float32)
    var = jax.random.exponential(k_var, (1,), dtype=jnp.float32)  # unused in forward
    W = tau_w * jax.random.normal(k_w, (no_in, no_out), dtype=jnp.float32)
    b = jax.random.normal(k_b, (no_out,), dtype=jnp.float32)
    return W, b, tau_w, var


# TODO(synk): reset_parameters / prior_log_prob / likelihood / log_prob are
# distributional bookkeeping with no kernel equivalent; only forward() is ported.

if __name__ == "__main__":
    # Small shapes consistent with BaseModel(no_in, no_out) applied to a batch of X.
    no_in, no_out, batch = 32, 16, 8

    key = jax.random.PRNGKey(0)
    k_x, k_p = jax.random.split(key)
    X = jax.random.normal(k_x, (batch, no_in), dtype=jnp.float32)
    W, b, tau_w, var = init_params(k_p, no_in, no_out)

    model = PallasBaseModel(W, b)          # tiny problem -> grid-less bypass path
    out = jax.block_until_ready(model(X))
    ref = jnp.maximum(X @ W + b, 0.0)
    assert out.shape == (batch, no_out)
    assert jnp.allclose(out, ref, atol=1e-5, rtol=1e-5)

    # Single-K-strip tiled path (2-D parallel grid, padded weights built once).
    k_x2, k_p2 = jax.random.split(jax.random.PRNGKey(1))
    X2 = jax.random.normal(k_x2, (512, 384), dtype=jnp.float32)
    W2, b2, _, _ = init_params(k_p2, 384, 320)
    model2 = PallasBaseModel(W2, b2, tm=256, tn=128, force_tiled=True)
    out2 = jax.block_until_ready(model2(X2))
    ref2 = jnp.maximum(X2 @ W2 + b2, 0.0)
    assert out2.shape == (512, 320)
    assert jnp.allclose(out2, ref2, atol=1e-4, rtol=1e-4)

    # Multi-K reduction path (K split across the last grid axis, accumulate in o_ref).
    k_x3, k_p3 = jax.random.split(jax.random.PRNGKey(2))
    X3 = jax.random.normal(k_x3, (256, 1536), dtype=jnp.float32)
    W3, b3, _, _ = init_params(k_p3, 1536, 384)
    model3 = PallasBaseModel(W3, b3, tm=128, tn=128, tk=512)
    out3 = jax.block_until_ready(model3(X3))
    ref3 = jnp.maximum(X3 @ W3 + b3, 0.0)
    assert out3.shape == (256, 384)
    assert jnp.allclose(out3, ref3, atol=1e-4, rtol=1e-4)

    print("KERNEL_OK")
</pallas_src>

<mosaic_0001>
module attributes {stable_mosaic.version = 11 : i64} {
  func.func @_fused_linear_relu_kernel(%arg0: memref<8x32xf32, #tpu.memory_space<vmem>>, %arg1: memref<32x16xf32, #tpu.memory_space<vmem>>, %arg2: memref<1x16xf32, #tpu.memory_space<vmem>>, %arg3: memref<8x16xf32, #tpu.memory_space<vmem>>) attributes {dimension_semantics = [], scalar_prefetch = 0 : i64, scratch_operands = 0 : i64, tpu.core_type = #tpu.core_type<tc>} {
    %c0 = arith.constant 0 : index
    %c0_0 = arith.constant 0 : index
    %0 = vector.load %arg0[%c0, %c0_0] : memref<8x32xf32, #tpu.memory_space<vmem>>, vector<8x32xf32>
    %c0_1 = arith.constant 0 : index
    %c0_2 = arith.constant 0 : index
    %1 = vector.load %arg1[%c0_1, %c0_2] : memref<32x16xf32, #tpu.memory_space<vmem>>, vector<32x16xf32>
    %cst = arith.constant dense<0.000000e+00> : vector<8x16xf32>
    %2 = tpu.matmul %0, %1, %cst {dimension_numbers = #tpu.dot_dimension_numbers<[1], [0], [0], [1], [0, 0, 1, 1], [], []>} : vector<8x32xf32>, vector<32x16xf32>, vector<8x16xf32> -> vector<8x16xf32>
    %c0_3 = arith.constant 0 : index
    %c0_4 = arith.constant 0 : index
    %3 = vector.load %arg2[%c0_3, %c0_4] : memref<1x16xf32, #tpu.memory_space<vmem>>, vector<1x16xf32>
    %4 = vector.broadcast %3 : vector<1x16xf32> to vector<8x16xf32>
    %5 = arith.addf %2, %4 : vector<8x16xf32>
    %cst_5 = arith.constant 0.000000e+00 : f32
    %6 = vector.broadcast %cst_5 : f32 to vector<8x16xf32>
    %7 = arith.maximumf %5, %6 : vector<8x16xf32>
    %c0_6 = arith.constant 0 : index
    %c0_7 = arith.constant 0 : index
    %8 = vector.load %arg3[%c0_6, %c0_7] : memref<8x16xf32, #tpu.memory_space<vmem>>, vector<8x16xf32>
    tpu.vector_store %arg3[%c0_6, %c0_7], %7 {strides = array<i32>} : memref<8x16xf32, #tpu.memory_space<vmem>>, vector<8x16xf32>,
    return
  }
}

</mosaic_0001>

<llo_original>
// kernel: _small_forward.1
$region0: #{_small_forward.1}
  #allocation0 [shape = 'u32[]', space=smem, size = 0x4, offset = 0x4, fixed_abs, tag = 'smem constant byte address 0x4 - core index']
  #allocation1 [shape = 'u32[72,128]{1,0:T(1,128)}', space=vmem, size = 0x9000, scoped, tag = 'internal scratch']
  %s0 = inlined_call_operand.vmem [shape: f32[8,32], index: 0, kind: input, shape index: {}]
  %s1 = inlined_call_operand.vmem [shape: f32[32,16], index: 1, kind: input, shape index: {}]
  %s2 = inlined_call_operand.vmem [shape: f32[1,16], index: 2, kind: input, shape index: {}]
  %s3 = inlined_call_operand.hbm [shape: f32[8,16], index: 3, kind: output, shape index: {}]
  %s4 = sld [smem:[#allocation0]]
  $region22: #{_small_forward.1} parent=0
    _
  %s6 = ssub.s32 1, %s4
  %s7 = scalar_select 0, %s6, %s4
  $region1: #{_small_forward.1} parent=0
    #allocation2 [shape = 'u8[4096]{0}', space=vmem, size = 0x1000, scoped, tag = 'output window, operand 0, single buffered']
    #allocation3 [shape = 's32[1]{0}', space=sflag, size = 0x4, scoped, tag = 'scoped memory for _small_forward.1']
    %8 = vsyncpa [#allocation3], 0
    // Predicated region
    $region2: #{_small_forward.1} parent=1 // pred_check
      _
    $region3: #{_small_forward.1} parent=1 // pred_check_branch
      %10 = sbr.rel (0) target = $region5
    $region4: #{_small_forward.1} parent=1 // pred_region
      _
    $region5: #{_small_forward.1} parent=1 // pred_fallthru
      _
    // Predicated region
    $region6: #{_small_forward.1} parent=1 // pred_check
      _
    $region7: #{_small_forward.1} parent=1 // pred_check_branch
      %12 = sbr.rel (0) target = $region9
    $region8: #{_small_forward.1} parent=1 // pred_region
      _
    $region9: #{_small_forward.1} parent=1 // pred_fallthru
      _
    // Predicated region
    $region10: #{_small_forward.1} parent=1 // pred_check
      _
    $region11: #{_small_forward.1} parent=1 // pred_check_branch
      %14 = sbr.rel (0) target = $region13
    $region12: #{_small_forward.1} parent=1 // pred_region
      _
    $region13: #{_small_forward.1} parent=1 // pred_fallthru
      _
    %v15 = vld [vmem:[%s0] sm:$0xff]
    %v16 = vld [vmem:[%s1] sm:$0xff]
    %v17 = vld [vmem:[%s1 + $0x8] sm:$0xff]
    %v18 = vld [vmem:[%s1 + $0x10] sm:$0xff]
    %v19 = vld [vmem:[%s1 + $0x18] sm:$0xff]
    %v20 = vld [vmem:[%s2] sm:$0x1]
    %v22 = vperm.slane %v20, 0
    %vm24 = vcmask 261120
    %v26 = vsel %vm24, %v15, 0
    %28 = vmatpush.msra.mxu0 0.0
    %29 = vmatpush.msra.mxu0 0.0
    %30 = vmatpush.msra.mxu0 0.0
    %31 = vmatpush.msra.mxu0 0.0
    %32 = vmatpush.msra.mxu0 0.0
    %33 = vmatpush.msra.mxu0 0.0
    %34 = vmatpush.msra.mxu0 0.0
    %35 = vmatpush.msra.mxu0 0.0
    %36 = vmatpush.msra.mxu0 0.0
    %37 = vmatpush.msra.mxu0 0.0
    %38 = vmatpush.msra.mxu0 0.0
    %39 = vmatpush.msra.mxu0 0.0
    %40 = vmatpush.msra.mxu0 %v19
    %41 = vmatpush.msra.mxu0 %v18
    %42 = vmatpush.msra.mxu0 %v17
    %43 = vmatpush.msra.mxu0 %v16
    %44 = vmatmul.f32.gmra.mxu0 %v26
    %v45 = vpop.f32.mrf.mxu0
    %v46 = vadd.f32 %v22, %v45
    %47 = vdwg.mxu0
    %v48 = vmax.f32 %v46, 0.0
    %vm49 = vcmask 130048
    %50 = vst.msk [vmem:[#allocation2] sm:$0xff] %vm49, %v48
    // Predicated region
    $region14: #{_small_forward.1} parent=1 // pred_check
      _
    $region15: #{_small_forward.1} parent=1 // pred_check_branch
      %52 = sbr.rel (0) target = $region17
    $region16: #{_small_forward.1} parent=1 // pred_region
      %54 = vsyncadd [#allocation3], 0
      %s56 = sshll.u32 [#allocation2], 4
      %s57 = int_to_ptr.vmem [resolvable:$true] %s56
      %s58 = sshll.u32 %s3, 4
      %s59 = int_to_ptr.hbm [resolvable:$true] %s58
      %61 = dma.vmem_to_hbm [thread:$0]  %s57, 128, %s59, [#allocation3]
    $region17: #{_small_forward.1} parent=1 // pred_fallthru
      _
    // Predicated region
    $region18: #{_small_forward.1} parent=1 // pred_check
      _
    $region19: #{_small_forward.1} parent=1 // pred_check_branch
      %63 = sbr.rel (0) target = $region21
    $region20: #{_small_forward.1} parent=1 // pred_region
      %65 = dma.done [#allocation3], 128
    $region21: #{_small_forward.1} parent=1 // pred_fallthru
      _
    %66 = vsyncpa [#allocation3], 1

</llo_original>
